<compile_context>
chip_gen: v7x
topology: tpu7x:2x2x1
jax: 0.10.0
libtpu: 0.0.40
codegen_flags: <defaults>
</compile_context>

<pallas_src>
import functools

import jax
import jax.numpy as jnp
from jax.experimental import pallas as pl
from jax.experimental.pallas import tpu as pltpu

_LANE = 128                      # lane multiple (last dim)
_SPLIT_TILE_HW = 16384           # lanes per HW tile when the spatial axis must be split
_MIN_V7X_SPLIT_BYTES = 256 * 1024  # don't force a megacore split below this per-tile size


def _round_up(x, m):
    return -(-x // m) * m


def _round_down(x, m):
    return (x // m) * m


@functools.lru_cache(maxsize=1)
def _tpu_generation():
    try:
        kind = jax.devices()[0].device_kind.lower()
    except Exception:
        return 6
    if "v7" in kind or "tpu7" in kind or "7x" in kind:
        return 7
    for g in (6, 5, 4, 3, 2):
        if f"v{g}" in kind:
            return g
    return 6


# ---------------------------------------------------------------------------
# Kernel bodies
# ---------------------------------------------------------------------------
def _gap_kernel_direct(x_ref, o_ref, *, inv_area):
    """Whole spatial extent in one lane block: reduce, scale, cast, store."""
    s = jnp.sum(x_ref[...], axis=-1, dtype=jnp.float32, keepdims=True)
    o_ref[...] = (s * inv_area).astype(o_ref.dtype)


def _gap_kernel_split(x_ref, o_ref, acc_ref, *, inv_area, hw, tile_hw, need_mask):
    """Huge spatial maps: accumulate 128-multiple HW tiles into an f32 scratch."""
    k = pl.program_id(1)

    @pl.when(k == 0)
    def _():
        acc_ref[...] = jnp.zeros_like(acc_ref)

    x = x_ref[...]
    if need_mask:
        # The trailing HW block may extend past the true spatial extent; the
        # out-of-bounds VMEM contents are unspecified, so zero those lanes.
        lane_ids = k * tile_hw + jax.lax.broadcasted_iota(jnp.int32, x.shape, 1)
        x = jnp.where(lane_ids < hw, x, jnp.zeros_like(x))

    # Fold the f32 upcast into the reduction (no full f32 copy of the tile).
    acc_ref[...] += jnp.sum(x, axis=-1, dtype=jnp.float32, keepdims=True)

    @pl.when(k == pl.num_programs(1) - 1)
    def _():
        o_ref[...] = (acc_ref[...] * inv_area).astype(o_ref.dtype)


# ---------------------------------------------------------------------------
# Wrapper
# ---------------------------------------------------------------------------
def flexible_avg_pool2d(x, *, vmem_budget_bytes=None):
    """Pallas equivalent of F.avg_pool2d(x, kernel_size=x.shape[2]) for NCHW x."""
    n, c, h, w = x.shape
    assert h == w, "FlexibleAvgPool2d Pallas kernel requires square spatial dims"

    nc = n * c
    hw = h * w
    inv_area = 1.0 / float(h * h)  # avg_pool2d divides by kernel_size**2

    dtype = x.dtype
    dtype_bytes = jnp.dtype(dtype).itemsize
    sublane = max(8, 32 // dtype_bytes)  # packed-dtype sublane multiple

    gen = _tpu_generation()
    if vmem_budget_bytes is None:
        # Total budget for the kernel's pipelined buffers (inputs are the bulk).
        vmem_budget_bytes = (24 << 20) if gen >= 6 else (12 << 20)
    vmem_budget_bytes = int(vmem_budget_bytes)
    vmem_limit_bytes = vmem_budget_bytes + (8 << 20)          # compiler headroom
    vmem_limit_bytes = min(vmem_limit_bytes, (48 << 20) if gen >= 7 else (110 << 20))

    # VMEM cost per NC row for the narrow (lane-padded) buffers.
    out_row_vmem = 2 * _LANE * dtype_bytes    # double-buffered (tile_nc, 1) output
    acc_row_vmem = _LANE * 4                  # (tile_nc, 1) f32 accumulator

    # ---- HW (lane / reduction) axis -----------------------------------------
    hw_row_vmem = _round_up(hw, _LANE) * dtype_bytes          # padded VMEM row bytes
    if sublane * (2 * hw_row_vmem + out_row_vmem) <= vmem_budget_bytes:
        # Common case: full H*W as one lane block (legal without 128-multiple),
        # single reduction step, no masking, no accumulator scratch.
        tile_hw = hw
        num_k = 1
        need_mask = False
    else:
        # Rare: giant spatial map.  Split HW into 128-multiple tiles + accumulate.
        lane_cap = max(_LANE, vmem_budget_bytes // (2 * sublane * dtype_bytes))
        lane_cap = max(_LANE, _round_down(lane_cap, _LANE))
        tile_hw = min(_SPLIT_TILE_HW, lane_cap)
        num_k = -(-hw // tile_hw)
        need_mask = (hw % tile_hw) != 0

    # ---- NC (row / parallel) axis --------------------------------------------
    row_cost = 2 * _round_up(tile_hw, _LANE) * dtype_bytes + out_row_vmem
    if num_k > 1:
        row_cost += acc_row_vmem
    rows_cap = max(sublane, _round_down(vmem_budget_bytes // row_cost, sublane))
    tile_nc = min(rows_cap, nc)  # == nc (full dim) or a sublane multiple < nc

    # v7x megacore: prefer an even number (>=2) of NC tiles so both TensorCores
    # get balanced work, as long as each tile stays big enough to amortize the
    # per-grid-step overhead.  v5e/v6e have a single TensorCore.
    if gen >= 7 and nc > sublane:
        num_i = -(-nc // tile_nc)
        if num_i % 2 == 1:
            cand = max(sublane, _round_up(-(-nc // (num_i + 1)), sublane))
            new_num_i = -(-nc // cand)
            useful = cand * min(tile_hw, hw) * dtype_bytes
            if cand < tile_nc and new_num_i % 2 == 0 and useful >= _MIN_V7X_SPLIT_BYTES:
                tile_nc = cand

    num_i = -(-nc // tile_nc)

    # ---- pallas_call ----------------------------------------------------------
    x2d = x.reshape(nc, hw)  # contiguous reshape: no data movement, no padding

    if num_k == 1:
        kernel = functools.partial(_gap_kernel_direct, inv_area=inv_area)
        grid = (num_i,)
        in_specs = [pl.BlockSpec((tile_nc, tile_hw), lambda i: (i, 0))]
        out_specs = pl.BlockSpec((tile_nc, 1), lambda i: (i, 0))
        scratch_shapes = []
        dim_sem = ("parallel",)
    else:
        kernel = functools.partial(
            _gap_kernel_split, inv_area=inv_area, hw=hw, tile_hw=tile_hw,
            need_mask=need_mask)
        grid = (num_i, num_k)
        in_specs = [pl.BlockSpec((tile_nc, tile_hw), lambda i, k: (i, k))]
        out_specs = pl.BlockSpec((tile_nc, 1), lambda i, k: (i, 0))
        scratch_shapes = [pltpu.VMEM((tile_nc, 1), jnp.float32)]
        dim_sem = ("parallel", "arbitrary")

    out2d = pl.pallas_call(
        kernel,
        out_shape=jax.ShapeDtypeStruct((nc, 1), dtype),
        grid_spec=pltpu.PrefetchScalarGridSpec(
            num_scalar_prefetch=0,
            grid=grid,
            in_specs=in_specs,
            out_specs=out_specs,
            scratch_shapes=scratch_shapes,
        ),
        compiler_params=pltpu.CompilerParams(
            dimension_semantics=dim_sem,
            vmem_limit_bytes=vmem_limit_bytes,
        ),
    )(x2d)

    return out2d.reshape(n, c, 1, 1)


if __name__ == "__main__":
    key = jax.random.PRNGKey(0)
    k1, k2, k3 = jax.random.split(key, 3)

    # Primary shape implied by the module usage.
    x = jax.random.normal(k1, (2, 4, 16, 16), dtype=jnp.float32)
    out = flexible_avg_pool2d(x)
    jax.block_until_ready(out)
    ref = jnp.mean(x, axis=(2, 3), keepdims=True)
    assert out.shape == (2, 4, 1, 1)
    assert jnp.allclose(out, ref, atol=1e-5, rtol=1e-5)

    # Ragged shape: nc and hw are not hardware multiples (partial blocks, no
    # host padding, full-array lane block of width 49).
    x2 = jax.random.normal(k2, (1, 3, 7, 7), dtype=jnp.float32)
    out2 = flexible_avg_pool2d(x2)
    jax.block_until_ready(out2)
    ref2 = jnp.mean(x2, axis=(2, 3), keepdims=True)
    assert out2.shape == (1, 3, 1, 1)
    assert jnp.allclose(out2, ref2, atol=1e-5, rtol=1e-5)

    # Force the split-HW accumulator + lane-mask path with a tiny VMEM budget.
    x3 = jax.random.normal(k3, (1, 2, 20, 20), dtype=jnp.float32)
    out3 = flexible_avg_pool2d(x3, vmem_budget_bytes=4096)
    jax.block_until_ready(out3)
    ref3 = jnp.mean(x3, axis=(2, 3), keepdims=True)
    assert out3.shape == (1, 2, 1, 1)
    assert jnp.allclose(out3, ref3, atol=1e-5, rtol=1e-5)

    print("KERNEL_OK")
</pallas_src>

<mosaic_0001>
module attributes {stable_mosaic.version = 11 : i64} {
  func.func @_gap_kernel_direct(%arg0: i32, %arg1: memref<8x256xf32, #tpu.memory_space<vmem>>, %arg2: memref<8x1xf32, #tpu.memory_space<vmem>>) attributes {dimension_semantics = [#tpu.dimension_semantics<parallel>], iteration_bounds = array<i64: 1>, scalar_prefetch = 0 : i64, scratch_operands = 0 : i64, tpu.core_type = #tpu.core_type<tc>, window_params = [{transform_indices = @transform_0, window_bounds = array<i64: 8, 256>}, {transform_indices = @transform_1, window_bounds = array<i64: 8, 1>}]} {
    %c0 = arith.constant 0 : index
    %c0_0 = arith.constant 0 : index
    %0 = vector.load %arg1[%c0, %c0_0] : memref<8x256xf32, #tpu.memory_space<vmem>>, vector<8x256xf32>
    %cst = arith.constant dense<0.000000e+00> : vector<8xf32>
    %1 = vector.multi_reduction <add>, %0, %cst [1] : vector<8x256xf32> to vector<8xf32>
    %2 = vector.shape_cast %1 : vector<8xf32> to vector<8x1xf32>
    %cst_1 = arith.constant 3.906250e-03 : f32
    %3 = vector.broadcast %cst_1 : f32 to vector<8x1xf32>
    %4 = arith.mulf %2, %3 : vector<8x1xf32>
    %c0_2 = arith.constant 0 : index
    %c0_3 = arith.constant 0 : index
    %5 = vector.load %arg2[%c0_2, %c0_3] : memref<8x1xf32, #tpu.memory_space<vmem>>, vector<8x1xf32>
    tpu.vector_store %arg2[%c0_2, %c0_3], %4 {strides = array<i32>} : memref<8x1xf32, #tpu.memory_space<vmem>>, vector<8x1xf32>,
    return
  }
  func.func @transform_0(%arg0: i32) -> (i32, i32) {
    %c0_i32 = arith.constant 0 : i32
    %c0_i32_0 = arith.constant 0 : i32
    return %arg0, %c0_i32 : i32, i32
  }
  func.func @transform_1(%arg0: i32) -> (i32, i32) {
    %c0_i32 = arith.constant 0 : i32
    %c0_i32_0 = arith.constant 0 : i32
    return %arg0, %c0_i32 : i32, i32
  }
}

</mosaic_0001>

<llo_original>
// kernel: tpu_custom_call.1
$region0: #{tpu_custom_call.1}
  #allocation0 [shape = 'u32[]', space=smem, size = 0x4, offset = 0x4, fixed_abs, tag = 'smem constant byte address 0x4 - core index']
  #allocation1 [shape = 'u32[144,128]{1,0:T(1,128)}', space=vmem, size = 0x12000, scoped, tag = 'internal scratch']
  %s0 = inlined_call_operand.hbm [shape: f32[8,256], index: 0, kind: input, shape index: {}]
  %s1 = inlined_call_operand.vmem [shape: f32[8,1], index: 1, kind: output, shape index: {}]
  %s2 = sld [smem:[#allocation0]]
  $region18: #{tpu_custom_call.1} parent=0
    _
  %s4 = ssub.s32 1, %s2
  %s5 = scalar_select 0, %s4, %s2
  $region1: #{tpu_custom_call.1} parent=0
    #allocation2 [shape = 'u8[8192]{0}', space=vmem, size = 0x2000, scoped, tag = 'input window, operand 0, single buffered']
    #allocation3 [shape = 's32[1]{0}', space=sflag, size = 0x4, scoped, tag = 'scoped memory for tpu_custom_call.1']
    %6 = vsyncpa [#allocation3], 0
    // Predicated region
    $region2: #{tpu_custom_call.1} parent=1 // pred_check
      _
    $region3: #{tpu_custom_call.1} parent=1 // pred_check_branch
      %8 = sbr.rel (0) target = $region5
    $region4: #{tpu_custom_call.1} parent=1 // pred_region
      %s10 = ssub.s32 256, 256
      %11 = vsyncadd [#allocation3], %s10
      %s13 = sshll.u32 [#allocation2], 4
      %s14 = int_to_ptr.vmem [resolvable:$true] %s13
      %16 = dma.hbm_to_vmem [thread:$0]  %s0, 256, %s14, [#allocation3]
    $region5: #{tpu_custom_call.1} parent=1 // pred_fallthru
      _
    // Predicated region
    $region6: #{tpu_custom_call.1} parent=1 // pred_check
      _
    $region7: #{tpu_custom_call.1} parent=1 // pred_check_branch
      %18 = sbr.rel (0) target = $region9
    $region8: #{tpu_custom_call.1} parent=1 // pred_region
      %19 = dma.done [#allocation3], 256
    $region9: #{tpu_custom_call.1} parent=1 // pred_fallthru
      _
    %v20 = vld [vmem:[#allocation2] sm:$0xff]
    %v21 = vld [vmem:[#allocation2 + $0x8] sm:$0xff]
    %v22 = vadd.f32 %v20, %v21
    %23 = vadd.xlane.f32.xlu0 %v22
    %v24 = vpop.xlane.xlu0 %23
    %v25 = vmul.f32 %v24, 0.00390625
    %vm26 = vcmask 7168
    %27 = vst.msk [vmem:[%s1] sm:$0xff] %vm26, %v25
    // Predicated region
    $region10: #{tpu_custom_call.1} parent=1 // pred_check
      _
    $region11: #{tpu_custom_call.1} parent=1 // pred_check_branch
      %29 = sbr.rel (0) target = $region13
    $region12: #{tpu_custom_call.1} parent=1 // pred_region
      _
    $region13: #{tpu_custom_call.1} parent=1 // pred_fallthru
      _
    // Predicated region
    $region14: #{tpu_custom_call.1} parent=1 // pred_check
      _
    $region15: #{tpu_custom_call.1} parent=1 // pred_check_branch
      %31 = sbr.rel (0) target = $region17
    $region16: #{tpu_custom_call.1} parent=1 // pred_region
      _
    $region17: #{tpu_custom_call.1} parent=1 // pred_fallthru
      _
    %32 = vsyncpa [#allocation3], 1

</llo_original>
